<compile_context>
chip_gen: v5e
topology: v5e:2x2
jax: 0.10.0
libtpu: 0.0.40
codegen_flags: <defaults>
</compile_context>

<pallas_src>
import math
from functools import partial

import jax
import jax.numpy as jnp
from jax.experimental import pallas as pl
from jax.experimental.pallas import tpu as pltpu

LANE = 128


def _rup(x, m=LANE):
    return ((x + m - 1) // m) * m


def _vmem_limit_bytes():
    cap = 128 * 1024 * 1024
    try:
        cap = int(getattr(pltpu.get_tpu_info(), "vmem_capacity_bytes", cap))
    except Exception:
        pass
    return int(min(cap // 2, 64 * 1024 * 1024))


# ----------------------------- in-kernel helpers -----------------------------

def _gelu_exact(x):
    # PyTorch F.gelu default (exact, erf-based).
    return 0.5 * x * (1.0 + jax.lax.erf(x * (1.0 / math.sqrt(2.0))))


def _layernorm_pad(x, g, b, true_d, eps):
    # x has zero-valued pad columns; statistics over the true_d real columns.
    s1 = jnp.sum(x, axis=-1, keepdims=True)
    s2 = jnp.sum(x * x, axis=-1, keepdims=True)
    mu = s1 / true_d
    var = s2 / true_d - mu * mu
    return (x - mu) * jax.lax.rsqrt(var + eps) * g + b


# ----------------------------- Pallas kernels -----------------------------

def _embed_pe_kernel(x_ref, wt_ref, b_ref, pe_ref, cond_ref, quant_ref, o_ref):
    # Fused InputProcess linear + PositionalEncoding add (the spec module) +
    # prefix-token concat.  x:(1,n,Cp)  wt:(Cp,Dp) bf16  pe:(n,Dp)
    h = jnp.dot(x_ref[0].astype(jnp.bfloat16), wt_ref[...],
                preferred_element_type=jnp.float32)
    h = h + b_ref[...] + pe_ref[...]
    # TODO(synk): train-mode dropout would use pltpu.prng_*; eval => identity.
    seq = jnp.concatenate([cond_ref[0], quant_ref[0], h], axis=0)   # (T, Dp)
    o_ref[0] = seq.astype(o_ref.dtype)


def _encoder_stack_kernel(x_ref, bias_ref, wqkv_ref, bqkv_ref, wo_ref, bo_ref,
                          g1_ref, b1_ref, w1_ref, bf1_ref, w2_ref, bf2_ref,
                          g2_ref, b2_ref, o_ref, act_ref, *,
                          num_heads, head_dim, head_pad, true_d, eps=1e-5):
    # One post-LN TransformerEncoderLayer; grid = (batch, layer).  The running
    # activation is carried across the layer axis in a f32 VMEM scratch.
    f32 = jnp.float32
    l = pl.program_id(1)

    @pl.when(l == 0)
    def _():
        act_ref[...] = x_ref[0].astype(f32)

    x = act_ref[...]                       # (T, Dp) f32
    kbias = bias_ref[0]                    # (1, T) additive key-pad bias
    hp = head_pad
    hpt = num_heads * hp
    scale = 1.0 / math.sqrt(head_dim)

    # --- self attention ---
    qkv = jnp.dot(x.astype(jnp.bfloat16), wqkv_ref[0],
                  preferred_element_type=f32) + bqkv_ref[0]          # (T, 3*hpt)
    q, k, v = qkv[:, :hpt], qkv[:, hpt:2 * hpt], qkv[:, 2 * hpt:]

    heads = []
    for h in range(num_heads):             # static unroll; 128-aligned slices
        sl = slice(h * hp, (h + 1) * hp)
        qh = q[:, sl].astype(jnp.bfloat16)
        kh = k[:, sl].astype(jnp.bfloat16)
        vh = v[:, sl].astype(jnp.bfloat16)
        s = jax.lax.dot_general(qh, kh, (((1,), (1,)), ((), ())),
                                preferred_element_type=f32) * scale + kbias
        m = jnp.max(s, axis=-1, keepdims=True)
        p = jnp.exp(s - m)
        lsum = jnp.sum(p, axis=-1, keepdims=True)
        oh = jax.lax.dot_general(p.astype(jnp.bfloat16), vh,
                                 (((1,), (0,)), ((), ())),
                                 preferred_element_type=f32)
        # deferred normalization, EUP reciprocal, guarded vs fully-masked rows
        heads.append(oh * pl.reciprocal(jnp.maximum(lsum, 1e-30), approx=True))

    cat = jnp.concatenate(heads, axis=-1)                            # (T, hpt)
    attn = jnp.dot(cat.astype(jnp.bfloat16), wo_ref[0],
                   preferred_element_type=f32) + bo_ref[0]           # one wide K

    src = _layernorm_pad(x + attn, g1_ref[0], b1_ref[0], true_d, eps)

    # --- feed forward ---
    ff = jnp.dot(src.astype(jnp.bfloat16), w1_ref[0],
                 preferred_element_type=f32) + bf1_ref[0]
    ff = _gelu_exact(ff)
    ff = jnp.dot(ff.astype(jnp.bfloat16), w2_ref[0],
                 preferred_element_type=f32) + bf2_ref[0]

    out = _layernorm_pad(src + ff, g2_ref[0], b2_ref[0], true_d, eps)
    act_ref[...] = out

    @pl.when(l == pl.num_programs(1) - 1)
    def _():
        o_ref[0] = out.astype(o_ref.dtype)


def _head_kernel(qm1_ref, xs_ref, wd_ref, bd_ref, g_ref, be_ref, wf_ref, bf_ref,
                 wsel_ref, bsel_ref, o_ref, *, true_d, eps=1e-12):
    # Fused OutputProcess (dense -> gelu -> LN -> poseFinal) + per-sample
    # output_project matmul with vocab on the lane axis (lane-dense store).
    del qm1_ref  # consumed by the index_maps (scalar prefetch)
    f32 = jnp.float32
    h = jnp.dot(xs_ref[0], wd_ref[...], preferred_element_type=f32) + bd_ref[...]
    h = _gelu_exact(h)
    h = _layernorm_pad(h, g_ref[...], be_ref[...], true_d, eps)
    hs = jnp.dot(h.astype(jnp.bfloat16), wf_ref[...],
                 preferred_element_type=f32) + bf_ref[...]           # (n, Cp)
    out = jax.lax.dot_general(hs.astype(jnp.bfloat16), wsel_ref[0],
                              (((1,), (1,)), ((), ())),
                              preferred_element_type=f32)            # (n, Vp)
    # reproduces the module's `output += output + bias.unsqueeze(-1)` quirk
    o_ref[0] = 2.0 * out + bsel_ref[0]


# ----------------------------- kernel wrappers -----------------------------

def pallas_embed_pe(x, wt, bias, pe_n, cond_row, quant_row):
    B, n, Cp = x.shape
    Dp = wt.shape[1]
    T = n + 2
    return pl.pallas_call(
        _embed_pe_kernel,
        out_shape=jax.ShapeDtypeStruct((B, T, Dp), jnp.bfloat16),
        grid=(B,),
        in_specs=[
            pl.BlockSpec((1, n, Cp), lambda b: (b, 0, 0)),
            pl.BlockSpec((Cp, Dp), lambda b: (0, 0)),
            pl.BlockSpec((1, Dp), lambda b: (0, 0)),
            pl.BlockSpec((n, Dp), lambda b: (0, 0)),
            pl.BlockSpec((1, 1, Dp), lambda b: (b, 0, 0)),
            pl.BlockSpec((1, 1, Dp), lambda b: (b, 0, 0)),
        ],
        out_specs=pl.BlockSpec((1, T, Dp), lambda b: (b, 0, 0)),
        compiler_params=pltpu.CompilerParams(
            dimension_semantics=("parallel",),
            vmem_limit_bytes=_vmem_limit_bytes()),
    )(x, wt, bias, pe_n, cond_row, quant_row)


def pallas_encoder_stack(x, key_bias, stacked, dims):
    B, T, Dp = x.shape
    L = stacked["wqkv"].shape[0]
    H, HP, FFp = dims["H"], dims["HP"], dims["FFp"]
    HPT = H * HP

    wspec = lambda shape: pl.BlockSpec(shape, lambda b, l: (l, 0, 0))

    flops = B * L * (2 * T * Dp * 3 * HPT + H * 4 * T * T * HP
                     + 2 * T * HPT * Dp + 4 * T * Dp * FFp)
    transc = B * L * (H * T * T + T * FFp)
    bytes_acc = (B * L * (2 * T * Dp * 2 + T * 4)
                 + L * 2 * (Dp * 3 * HPT + HPT * Dp + 2 * Dp * FFp))

    return pl.pallas_call(
        partial(_encoder_stack_kernel, num_heads=H, head_dim=dims["hd"],
                head_pad=HP, true_d=dims["D"]),
        out_shape=jax.ShapeDtypeStruct((B, T, Dp), jnp.bfloat16),
        grid=(B, L),
        in_specs=[
            pl.BlockSpec((1, T, Dp), lambda b, l: (b, 0, 0)),
            pl.BlockSpec((1, 1, T), lambda b, l: (b, 0, 0)),
            wspec((1, Dp, 3 * HPT)), wspec((1, 1, 3 * HPT)),
            wspec((1, HPT, Dp)), wspec((1, 1, Dp)),
            wspec((1, 1, Dp)), wspec((1, 1, Dp)),
            wspec((1, Dp, FFp)), wspec((1, 1, FFp)),
            wspec((1, FFp, Dp)), wspec((1, 1, Dp)),
            wspec((1, 1, Dp)), wspec((1, 1, Dp)),
        ],
        out_specs=pl.BlockSpec((1, T, Dp), lambda b, l: (b, 0, 0)),
        scratch_shapes=[pltpu.VMEM((T, Dp), jnp.float32)],
        compiler_params=pltpu.CompilerParams(
            dimension_semantics=("parallel", "arbitrary"),
            vmem_limit_bytes=_vmem_limit_bytes()),
        cost_estimate=pl.CostEstimate(flops=int(flops),
                                      transcendentals=int(transc),
                                      bytes_accessed=int(bytes_acc)),
    )(x, key_bias,
      stacked["wqkv"], stacked["bqkv"], stacked["wo"], stacked["bo"],
      stacked["ln1_g"], stacked["ln1_b"], stacked["w1"], stacked["b1"],
      stacked["w2"], stacked["b2"], stacked["ln2_g"], stacked["ln2_b"])


def pallas_head(hidden, params, qm1, dims):
    B, n, Dp = hidden.shape
    Cp, Vp = dims["Cp"], dims["Vp"]
    full2 = lambda shape: pl.BlockSpec(shape, lambda b, q: (0, 0))
    gs = pltpu.PrefetchScalarGridSpec(
        num_scalar_prefetch=1, grid=(B,),
        in_specs=[
            pl.BlockSpec((1, n, Dp), lambda b, q: (b, 0, 0)),
            full2((Dp, Dp)), full2((1, Dp)), full2((1, Dp)), full2((1, Dp)),
            full2((Dp, Cp)), full2((1, Cp)),
            pl.BlockSpec((1, Vp, Cp), lambda b, q: (q[b], 0, 0)),
            pl.BlockSpec((1, 1, Vp), lambda b, q: (q[b], 0, 0)),
        ],
        out_specs=pl.BlockSpec((1, n, Vp), lambda b, q: (b, 0, 0)),
    )
    return pl.pallas_call(
        partial(_head_kernel, true_d=dims["D"]),
        out_shape=jax.ShapeDtypeStruct((B, n, Vp), jnp.float32),
        grid_spec=gs,
        compiler_params=pltpu.CompilerParams(
            dimension_semantics=("parallel",),
            vmem_limit_bytes=_vmem_limit_bytes()),
    )(qm1, hidden, params["op_dense_wt"], params["op_dense_b"],
      params["op_ln_g"], params["op_ln_b"],
      params["poseFinal_wt"], params["poseFinal_b"],
      params["output_proj_weight"], params["output_proj_bias"])


# ----------------------------- model forward -----------------------------

def trans_forward(params, motion_codes, qids, y, padding_mask):
    # motion_codes: (b, n, Cp); padding_mask: (b, n), True = pad
    b, n, _ = motion_codes.shape
    dims = params["dims"]

    # prefix-token embedding rows (tiny XLA gathers), concat fused in-kernel
    cond_row = (params["cond_emb_t"][y] + params["cond_emb_b"])[:, None, :]
    quant_row = (params["quant_emb_t"][qids] + params["quant_emb_b"])[:, None, :]

    xseq = pallas_embed_pe(motion_codes, params["poseEmbedding_wt"],
                           params["poseEmbedding_b"], params["pe"][:n],
                           cond_row, quant_row)                    # (b, n+2, Dp) bf16

    # additive key-padding bias, (b, 1, T); broadcast to (T, T) in-vreg inside
    # the attention (no (B*H, T, T) HBM materialization).
    pad = jnp.concatenate([jnp.zeros((b, 2), dtype=bool), padding_mask], axis=1)
    key_bias = jnp.where(pad, -1e30, 0.0).astype(jnp.float32)[:, None, :]

    h = pallas_encoder_stack(xseq, key_bias, params["stacked"], dims)
    return h[:, 2:, :]                                             # (b, n, Dp) bf16


def residual_transformer_forward(params, all_indices, y, m_lens, active_q_layers):
    bs, ntokens, num_q = all_indices.shape
    dims = params["dims"]
    pad_id = params["pad_id"]

    # guard: q layer 0 would wrap cumsum index to -1
    active_q_layers = jnp.clip(active_q_layers, 1, num_q - 1)

    # lengths_to_mask
    non_pad_mask = jnp.arange(ntokens)[None, :] < m_lens[:, None]   # (b, n)
    all_indices = jnp.where(non_pad_mask[..., None], all_indices, pad_id)

    # token embedding gather + cumulative residual sum (tiny XLA glue)
    idx = all_indices[..., :-1]                                     # (b, n, q-1)
    tew = params["token_embed_weight"]                              # (q-1, ntok1, Cp)
    gathered = tew[jnp.arange(num_q - 1)[None, None, :], idx]
    all_codes = jnp.transpose(gathered, (0, 1, 3, 2))               # (b, n, Cp, q-1)
    cumsum_codes = jnp.cumsum(all_codes, axis=-1)
    history_sum = cumsum_codes[jnp.arange(bs), :, :, active_q_layers - 1]  # (b, n, Cp)

    hidden = trans_forward(params, history_sum, active_q_layers, y, ~non_pad_mask)

    qm1 = (active_q_layers - 1).astype(jnp.int32)
    out = pallas_head(hidden, params, qm1, dims)                    # (b, n, Vp)
    # TODO(synk): cal_performance / q_schedule / CLIP text encoding are external.
    return out[..., :dims["ntok1"]]                                 # (b, n, ntok1)


# ----------------------------- parameter init -----------------------------

def init_params(key, *, code_dim, latent_dim, ff_size, num_layers, num_heads,
                num_actions, num_quantizers, num_tokens, max_len=64):
    bf16, f32 = jnp.bfloat16, jnp.float32
    D, C, FF, H = latent_dim, code_dim, ff_size, num_heads
    hd = D // H
    HP = _rup(hd)                   # per-head lane-aligned slot width
    Dp, Cp, FFp = _rup(D), _rup(C), _rup(FF)
    ntok1 = num_tokens + 1
    Vp = _rup(ntok1)

    def nrm(k, shape, std=0.02):
        return std * jax.random.normal(k, shape, dtype=f32)

    def pad2(a, r, c):
        return jnp.zeros((r, c), a.dtype).at[:a.shape[0], :a.shape[1]].set(a)

    def spread_cols(w):             # (D, D) -> (Dp, H*HP), head cols 128-aligned
        out = jnp.zeros((Dp, H * HP), f32)
        for h in range(H):
            out = out.at[:D, h * HP:h * HP + hd].set(w[:, h * hd:(h + 1) * hd])
        return out

    def spread_rows(w):             # (D, D) -> (H*HP, Dp), head rows 128-aligned
        out = jnp.zeros((H * HP, Dp), f32)
        for h in range(H):
            out = out.at[h * HP:h * HP + hd, :D].set(w[h * hd:(h + 1) * hd, :])
        return out

    keys = iter(jax.random.split(key, 512))
    p = dict(pad_id=num_tokens,
             dims=dict(D=D, Dp=Dp, C=C, Cp=Cp, FF=FF, FFp=FFp, H=H, hd=hd,
                       HP=HP, ntok1=ntok1, Vp=Vp))

    p["poseEmbedding_wt"] = pad2(nrm(next(keys), (C, D)), Cp, Dp).astype(bf16)
    p["poseEmbedding_b"] = jnp.zeros((1, Dp), f32)
    p["quant_emb_t"] = pad2(nrm(next(keys), (num_quantizers, D)), num_quantizers, Dp)
    p["quant_emb_b"] = jnp.zeros((1, Dp), f32)
    p["cond_emb_t"] = pad2(nrm(next(keys), (num_actions, D)), num_actions, Dp)
    p["cond_emb_b"] = jnp.zeros((1, Dp), f32)

    ones_pad = pad2(jnp.ones((1, D), f32), 1, Dp)
    zD = jnp.zeros((1, Dp), f32)
    wqkv_l, bqkv_l, wo_l, bo_l = [], [], [], []
    g1_l, be1_l, w1_l, b1_l, w2_l, b2_l, g2_l, be2_l = ([] for _ in range(8))
    for _ in range(num_layers):
        wq, wk, wv, wo = (nrm(next(keys), (D, D)) for _ in range(4))
        wqkv_l.append(jnp.concatenate(
            [spread_cols(wq), spread_cols(wk), spread_cols(wv)], axis=1).astype(bf16))
        bqkv_l.append(jnp.zeros((1, 3 * H * HP), f32))
        wo_l.append(spread_rows(wo).astype(bf16))
        bo_l.append(zD)
        g1_l.append(ones_pad); be1_l.append(zD)
        w1_l.append(pad2(nrm(next(keys), (D, FF)), Dp, FFp).astype(bf16))
        b1_l.append(jnp.zeros((1, FFp), f32))
        w2_l.append(pad2(nrm(next(keys), (FF, D)), FFp, Dp).astype(bf16))
        b2_l.append(zD)
        g2_l.append(ones_pad); be2_l.append(zD)

    stack = lambda xs: jnp.stack(xs, axis=0)
    p["stacked"] = dict(
        wqkv=stack(wqkv_l), bqkv=stack(bqkv_l), wo=stack(wo_l), bo=stack(bo_l),
        ln1_g=stack(g1_l), ln1_b=stack(be1_l), w1=stack(w1_l), b1=stack(b1_l),
        w2=stack(w2_l), b2=stack(b2_l), ln2_g=stack(g2_l), ln2_b=stack(be2_l))

    p["op_dense_wt"] = pad2(nrm(next(keys), (D, D)), Dp, Dp).astype(bf16)
    p["op_dense_b"] = jnp.zeros((1, Dp), f32)
    p["op_ln_g"] = ones_pad
    p["op_ln_b"] = jnp.zeros((1, Dp), f32)
    p["poseFinal_wt"] = pad2(nrm(next(keys), (D, C)), Dp, Cp).astype(bf16)
    p["poseFinal_b"] = jnp.zeros((1, Cp), f32)

    tew = jnp.zeros((num_quantizers - 1, ntok1, Cp), f32)
    tew = tew.at[:, :, :C].set(nrm(next(keys), (num_quantizers - 1, ntok1, C)))
    p["token_embed_weight"] = tew

    opw = jnp.zeros((num_quantizers - 1, Vp, Cp), f32)
    opw = opw.at[:, :ntok1, :C].set(nrm(next(keys), (num_quantizers - 1, ntok1, C)))
    p["output_proj_weight"] = opw.astype(bf16)
    p["output_proj_bias"] = jnp.zeros((num_quantizers - 1, 1, Vp), f32)

    # PositionalEncoding buffer pe (the spec module), columns zero-padded to Dp
    position = jnp.arange(max_len, dtype=f32)[:, None]
    div_term = jnp.exp(jnp.arange(0, D, 2, dtype=f32) * (-math.log(10000.0) / D))
    pe = jnp.zeros((max_len, D), f32)
    pe = pe.at[:, 0::2].set(jnp.sin(position * div_term))
    pe = pe.at[:, 1::2].set(jnp.cos(position * div_term))
    p["pe"] = pad2(pe, max_len, Dp)
    return p


# ----------------------------- main -----------------------------

if __name__ == "__main__":
    code_dim, latent_dim, ff_size = 16, 32, 64
    num_layers, num_heads = 2, 4
    num_actions, num_quantizers, num_tokens = 5, 4, 10
    bs, ntokens = 2, 8

    key = jax.random.PRNGKey(0)
    kp, ki = jax.random.split(key, 2)
    params = init_params(kp, code_dim=code_dim, latent_dim=latent_dim,
                         ff_size=ff_size, num_layers=num_layers,
                         num_heads=num_heads, num_actions=num_actions,
                         num_quantizers=num_quantizers, num_tokens=num_tokens)

    all_indices = jax.random.randint(ki, (bs, ntokens, num_quantizers), 0,
                                     num_tokens, dtype=jnp.int32)
    y = jnp.array([1, 3], dtype=jnp.int32)           # action labels
    m_lens = jnp.array([8, 5], dtype=jnp.int32)
    # TODO(synk): q_schedule draws random noise; use deterministic active layers
    active_q_layers = jnp.array([1, 2], dtype=jnp.int32)

    logits = residual_transformer_forward(params, all_indices, y, m_lens,
                                          active_q_layers)
    jax.block_until_ready(logits)
    assert logits.shape == (bs, ntokens, num_tokens + 1)
    assert bool(jnp.all(jnp.isfinite(logits)))
    print("KERNEL_OK")
</pallas_src>

<mosaic_0001>
module attributes {stable_mosaic.version = 11 : i64} {
  func.func @_embed_pe_kernel(%arg0: i32, %arg1: memref<1x8x128xf32, #tpu.memory_space<vmem>>, %arg2: memref<128x128xbf16, #tpu.memory_space<vmem>>, %arg3: memref<1x128xf32, #tpu.memory_space<vmem>>, %arg4: memref<8x128xf32, #tpu.memory_space<vmem>>, %arg5: memref<1x1x128xf32, #tpu.memory_space<vmem>>, %arg6: memref<1x1x128xf32, #tpu.memory_space<vmem>>, %arg7: memref<1x10x128xbf16, #tpu.memory_space<vmem>>) attributes {dimension_semantics = [#tpu.dimension_semantics<parallel>], iteration_bounds = array<i64: 2>, scalar_prefetch = 0 : i64, scratch_operands = 0 : i64, tpu.core_type = #tpu.core_type<tc>, window_params = [{transform_indices = @transform_0, window_bounds = array<i64: 1, 8, 128>}, {pipeline_mode = #tpu.pipeline_mode<synchronous>, transform_indices = @transform_1, window_bounds = array<i64: 128, 128>}, {pipeline_mode = #tpu.pipeline_mode<synchronous>, transform_indices = @transform_2, window_bounds = array<i64: 1, 128>}, {pipeline_mode = #tpu.pipeline_mode<synchronous>, transform_indices = @transform_3, window_bounds = array<i64: 8, 128>}, {transform_indices = @transform_4, window_bounds = array<i64: 1, 1, 128>}, {transform_indices = @transform_5, window_bounds = array<i64: 1, 1, 128>}, {transform_indices = @transform_6, window_bounds = array<i64: 1, 10, 128>}]} {
    %c0 = arith.constant 0 : index
    %c0_0 = arith.constant 0 : index
    %c0_1 = arith.constant 0 : index
    %0 = vector.load %arg1[%c0, %c0_0, %c0_1] : memref<1x8x128xf32, #tpu.memory_space<vmem>>, vector<1x8x128xf32>
    %1 = vector.shape_cast %0 : vector<1x8x128xf32> to vector<8x128xf32>
    %2 = arith.truncf %1 : vector<8x128xf32> to vector<8x128xbf16>
    %c0_2 = arith.constant 0 : index
    %c0_3 = arith.constant 0 : index
    %3 = vector.load %arg2[%c0_2, %c0_3] : memref<128x128xbf16, #tpu.memory_space<vmem>>, vector<128x128xbf16>
    %cst = arith.constant dense<0.000000e+00> : vector<8x128xf32>
    %4 = tpu.matmul %2, %3, %cst {dimension_numbers = #tpu.dot_dimension_numbers<[1], [0], [0], [1], [0, 0, 1, 1], [], []>} : vector<8x128xbf16>, vector<128x128xbf16>, vector<8x128xf32> -> vector<8x128xf32>
    %c0_4 = arith.constant 0 : index
    %c0_5 = arith.constant 0 : index
    %5 = vector.load %arg3[%c0_4, %c0_5] : memref<1x128xf32, #tpu.memory_space<vmem>>, vector<1x128xf32>
    %6 = vector.broadcast %5 : vector<1x128xf32> to vector<8x128xf32>
    %7 = arith.addf %4, %6 : vector<8x128xf32>
    %c0_6 = arith.constant 0 : index
    %c0_7 = arith.constant 0 : index
    %8 = vector.load %arg4[%c0_6, %c0_7] : memref<8x128xf32, #tpu.memory_space<vmem>>, vector<8x128xf32>
    %9 = arith.addf %7, %8 : vector<8x128xf32>
    %c0_8 = arith.constant 0 : index
    %c0_9 = arith.constant 0 : index
    %c0_10 = arith.constant 0 : index
    %10 = vector.load %arg5[%c0_8, %c0_9, %c0_10] : memref<1x1x128xf32, #tpu.memory_space<vmem>>, vector<1x1x128xf32>
    %11 = vector.shape_cast %10 : vector<1x1x128xf32> to vector<1x128xf32>
    %c0_11 = arith.constant 0 : index
    %c0_12 = arith.constant 0 : index
    %c0_13 = arith.constant 0 : index
    %12 = vector.load %arg6[%c0_11, %c0_12, %c0_13] : memref<1x1x128xf32, #tpu.memory_space<vmem>>, vector<1x1x128xf32>
    %13 = vector.shape_cast %12 : vector<1x1x128xf32> to vector<1x128xf32>
    %14 = tpu.concatenate %11, %13, %9 in 0 : vector<1x128xf32>, vector<1x128xf32>, vector<8x128xf32> -> vector<10x128xf32>
    %15 = arith.truncf %14 : vector<10x128xf32> to vector<10x128xbf16>
    %c0_14 = arith.constant 0 : index
    %c0_15 = arith.constant 0 : index
    %c0_16 = arith.constant 0 : index
    %16 = vector.load %arg7[%c0_14, %c0_15, %c0_16] : memref<1x10x128xbf16, #tpu.memory_space<vmem>>, vector<1x10x128xbf16>
    %17 = vector.shape_cast %16 : vector<1x10x128xbf16> to vector<10x128xbf16>
    %18 = vector.shape_cast %15 : vector<10x128xbf16> to vector<1x10x128xbf16>
    tpu.vector_store %arg7[%c0_14, %c0_15, %c0_16], %18 {strides = array<i32>} : memref<1x10x128xbf16, #tpu.memory_space<vmem>>, vector<1x10x128xbf16>,
    return
  }
  func.func @transform_0(%arg0: i32) -> (i32, i32, i32) {
    %c0_i32 = arith.constant 0 : i32
    %c0_i32_0 = arith.constant 0 : i32
    %c0_i32_1 = arith.constant 0 : i32
    return %arg0, %c0_i32, %c0_i32_0 : i32, i32, i32
  }
  func.func @transform_1(%arg0: i32) -> (i32, i32) {
    %c0_i32 = arith.constant 0 : i32
    %c0_i32_0 = arith.constant 0 : i32
    %c0_i32_1 = arith.constant 0 : i32
    return %c0_i32, %c0_i32_0 : i32, i32
  }
  func.func @transform_2(%arg0: i32) -> (i32, i32) {
    %c0_i32 = arith.constant 0 : i32
    %c0_i32_0 = arith.constant 0 : i32
    %c0_i32_1 = arith.constant 0 : i32
    return %c0_i32, %c0_i32_0 : i32, i32
  }
  func.func @transform_3(%arg0: i32) -> (i32, i32) {
    %c0_i32 = arith.constant 0 : i32
    %c0_i32_0 = arith.constant 0 : i32
    %c0_i32_1 = arith.constant 0 : i32
    return %c0_i32, %c0_i32_0 : i32, i32
  }
  func.func @transform_4(%arg0: i32) -> (i32, i32, i32) {
    %c0_i32 = arith.constant 0 : i32
    %c0_i32_0 = arith.constant 0 : i32
    %c0_i32_1 = arith.constant 0 : i32
    return %arg0, %c0_i32, %c0_i32_0 : i32, i32, i32
  }
  func.func @transform_5(%arg0: i32) -> (i32, i32, i32) {
    %c0_i32 = arith.constant 0 : i32
    %c0_i32_0 = arith.constant 0 : i32
    %c0_i32_1 = arith.constant 0 : i32
    return %arg0, %c0_i32, %c0_i32_0 : i32, i32, i32
  }
  func.func @transform_6(%arg0: i32) -> (i32, i32, i32) {
    %c0_i32 = arith.constant 0 : i32
    %c0_i32_0 = arith.constant 0 : i32
    %c0_i32_1 = arith.constant 0 : i32
    return %arg0, %c0_i32, %c0_i32_0 : i32, i32, i32
  }
}

</mosaic_0001>

<llo_original>
// kernel: tpu_custom_call.1
$region0: #{tpu_custom_call.1}
  #allocation0 [shape = 'u32[]', space=smem, size = 0x4, offset = 0x4, fixed_abs, tag = 'smem constant byte address 0x4 - core index']
  #allocation1 [shape = 'u32[72,128]{1,0:T(1,128)}', space=vmem, size = 0x9000, scoped, tag = 'internal scratch']
  %s0 = inlined_call_operand.hbm [shape: f32[2,8,128], index: 0, kind: input, shape index: {}]
  %s1 = inlined_call_operand.hbm [shape: bf16[128,128], index: 1, kind: input, shape index: {}]
  %s2 = inlined_call_operand.hbm [shape: f32[1,128], index: 2, kind: input, shape index: {}]
  %s3 = inlined_call_operand.hbm [shape: f32[8,128], index: 3, kind: input, shape index: {}]
  %s4 = inlined_call_operand.vmem [shape: f32[2,1,128], index: 4, kind: input, shape index: {}]
  %s5 = inlined_call_operand.vmem [shape: f32[2,1,128], index: 5, kind: input, shape index: {}]
  %s6 = inlined_call_operand.vmem [shape: bf16[2,10,128], index: 6, kind: output, shape index: {}]
  %s7 = sld [smem:[#allocation0]]
  $region73: #{tpu_custom_call.1} parent=0
    _
  %s9 = ssub.s32 1, %s7
  %s10 = scalar_select 0, %s9, %s7
  $region1: #{tpu_custom_call.1} parent=0
    #allocation2 [shape = 'u8[8192]{0}', space=vmem, size = 0x2000, scoped, tag = 'input window, operand 0']
    #allocation3 [shape = 's32[2]{0}', space=sflag, size = 0x8, scoped, tag = 'scoped memory for tpu_custom_call.1']
    #allocation4 [shape = 'u8[32768]{0}', space=vmem, size = 0x8000, scoped, tag = 'input window, operand 1, single buffered']
    #allocation5 [shape = 's32[1]{0}', space=sflag, size = 0x4, scoped, tag = 'scoped memory for tpu_custom_call.1']
    #allocation6 [shape = 'u8[512]{0}', space=vmem, size = 0x400, scoped, tag = 'input window, operand 2, single buffered']
    #allocation7 [shape = 'u8[4096]{0}', space=vmem, size = 0x1000, scoped, tag = 'input window, operand 3, single buffered']
    #allocation8 [shape = 's32[1]{0}', space=sflag, size = 0x4, scoped, tag = 'scoped memory for tpu_custom_call.1']
    %11 = vsyncpa [#allocation3], 0
    %s12 = scalar_lea.sflag [#allocation3], 1
    %13 = vsyncpa %s12, 0
    %14 = vsyncpa [#allocation5], 0
    %15 = vsyncpa [#allocation8], 0
    loop: start=0, step=1, limit=4
    $region2: #{tpu_custom_call.1} parent=1 // loop_pre_header
      _
    $region3: #{tpu_custom_call.1} parent=1 // loop_header
      %s17 = sphi 0, %s21
      %p18 = scmp.ge.s32.totalorder %s17, 4
      %s27 = sphi 0, %s29
      %s30 = sphi 0, %s27
      %s31 = sphi 0, %s30
      %s47 = sphi 0, %s31
      %s51 = sphi 0, %s51
      %s53 = sphi 0, %s51
      %s54 = sphi 0, %s53
      %s68 = sphi 0, %s54
      %s72 = sphi 0, %s72
      %s74 = sphi 0, %s72
      %s75 = sphi 0, %s74
      %s89 = sphi 0, %s75
      %s93 = sphi 0, %s93
      %s95 = sphi 0, %s93
      %s96 = sphi 0, %s95
      %s110 = sphi 0, %s96
      %s116 = sphi 0, %s118
      %s119 = sphi 0, %s116
      %s120 = sphi 0, %s119
      %s136 = sphi 0, %s120
      %s142 = sphi 0, %s144
      %s145 = sphi 0, %s142
      %s146 = sphi 0, %s145
      %s162 = sphi 0, %s146
      %s168 = sphi 0, %s170
      %s171 = sphi 0, %s168
      %s172 = sphi 0, %s171
      %s188 = sphi 0, %s172
    $region4: #{tpu_custom_call.1} parent=1 // loop_header_branch
      %20 = sbr.rel (%p18) target = $region8
    $region5: #{tpu_custom_call.1} parent=1 // loop_body
      %s22 = ssub.s32 %s17, 1
      %s23 = ssub.s32 %s17, 2
      %s24 = sadd.s32 %s17, 1
      %s25 = ssub.s32 %s17, %s24
      %p26 = scmp.eq.s32.totalorder %s25, 0
      %s28 = sadd.s32 %s27, 1
      %s29 = scalar_select %p26, %s27, %s28
      %p32 = pneg %p26
      %p33 = scmp.eq.s32.totalorder %s17, 1
      %p34 = por %p32, %p33
      %p35 = scmp.ne.s32.totalorder %s27, %s30
      %p36 = scmp.eq.s32.totalorder %s17, 0
      %p37 = por %p35, %p36
      %p38 = scmp.ne.s32.totalorder %s27, %s30
      %p39 = scmp.eq.s32.totalorder %s22, 1
      %p40 = por %p38, %p39
      %p41 = scmp.ne.s32.totalorder %s30, %s31
      %p42 = scmp.eq.s32.totalorder %s22, 0
      %p43 = por %p41, %p42
      %p44 = scmp.ne.s32.totalorder %s30, %s31
      %p45 = scmp.eq.s32.totalorder %s23, 1
      %p46 = por %p44, %p45
      %p48 = scmp.ne.s32.totalorder %s31, %s47
      %p49 = scmp.eq.s32.totalorder %s23, 0
      %p50 = por %p48, %p49
      %s52 = sadd.s32 %s51, 1
      %p55 = scmp.eq.s32.totalorder %s17, 1
      %p56 = scmp.ne.s32.totalorder %s51, %s53
      %p57 = scmp.eq.s32.totalorder %s17, 0
      %p58 = por %p56, %p57
      %p59 = scmp.ne.s32.totalorder %s51, %s53
      %p60 = scmp.eq.s32.totalorder %s22, 1
      %p61 = por %p59, %p60
      %p62 = scmp.ne.s32.totalorder %s53, %s54
      %p63 = scmp.eq.s32.totalorder %s22, 0
      %p64 = por %p62, %p63
      %p65 = scmp.ne.s32.totalorder %s53, %s54
      %p66 = scmp.eq.s32.totalorder %s23, 1
      %p67 = por %p65, %p66
      %p69 = scmp.ne.s32.totalorder %s54, %s68
      %p70 = scmp.eq.s32.totalorder %s23, 0
      %p71 = por %p69, %p70
      %s73 = sadd.s32 %s72, 1
      %p76 = scmp.eq.s32.totalorder %s17, 1
      %p77 = scmp.ne.s32.totalorder %s72, %s74
      %p78 = scmp.eq.s32.totalorder %s17, 0
      %p79 = por %p77, %p78
      %p80 = scmp.ne.s32.totalorder %s72, %s74
      %p81 = scmp.eq.s32.totalorder %s22, 1
      %p82 = por %p80, %p81
      %p83 = scmp.ne.s32.totalorder %s74, %s75
      %p84 = scmp.eq.s32.totalorder %s22, 0
      %p85 = por %p83, %p84
      %p86 = scmp.ne.s32.totalorder %s74, %s75
      %p87 = scmp.eq.s32.totalorder %s23, 1
      %p88 = por %p86, %p87
      %p90 = scmp.ne.s32.totalorder %s75, %s89
      %p91 = scmp.eq.s32.totalorder %s23, 0
      %p92 = por %p90, %p91
      %s94 = sadd.s32 %s93, 1
      %p97 = scmp.eq.s32.totalorder %s17, 1
      %p98 = scmp.ne.s32.totalorder %s93, %s95
      %p99 = scmp.eq.s32.totalorder %s17, 0
      %p100 = por %p98, %p99
      %p101 = scmp.ne.s32.totalorder %s93, %s95
      %p102 = scmp.eq.s32.totalorder %s22, 1
      %p103 = por %p101, %p102
      %p104 = scmp.ne.s32.totalorder %s95, %s96
      %p105 = scmp.eq.s32.totalorder %s22, 0
      %p106 = por %p104, %p105
      %p107 = scmp.ne.s32.totalorder %s95, %s96
      %p108 = scmp.eq.s32.totalorder %s23, 1
      %p109 = por %p107, %p108
      %p111 = scmp.ne.s32.totalorder %s96, %s110
      %p112 = scmp.eq.s32.totalorder %s23, 0
      %p113 = por %p111, %p112
      %s114 = ssub.s32 %s17, %s24
      %p115 = scmp.eq.s32.totalorder %s114, 0
      %s117 = sadd.s32 %s116, 1
      %s118 = scalar_select %p115, %s116, %s117
      %p121 = pneg %p115
      %p122 = scmp.eq.s32.totalorder %s17, 1
      %p123 = por %p121, %p122
      %p124 = scmp.ne.s32.totalorder %s116, %s119
      %p125 = scmp.eq.s32.totalorder %s17, 0
      %p126 = por %p124, %p125
      %p127 = scmp.ne.s32.totalorder %s116, %s119
      %p128 = scmp.eq.s32.totalorder %s22, 1
      %p129 = por %p127, %p128
      %p130 = scmp.ne.s32.totalorder %s119, %s120
      %p131 = scmp.eq.s32.totalorder %s22, 0
      %p132 = por %p130, %p131
      %p133 = scmp.ne.s32.totalorder %s119, %s120
      %p134 = scmp.eq.s32.totalorder %s23, 1
      %p135 = por %p133, %p134
      %p137 = scmp.ne.s32.totalorder %s120, %s136
      %p138 = scmp.eq.s32.totalorder %s23, 0
      %p139 = por %p137, %p138
      %s140 = ssub.s32 %s17, %s24
      %p141 = scmp.eq.s32.totalorder %s140, 0
      %s143 = sadd.s32 %s142, 1
      %s144 = scalar_select %p141, %s142, %s143
      %p147 = pneg %p141
      %p148 = scmp.eq.s32.totalorder %s17, 1
      %p149 = por %p147, %p148
      %p150 = scmp.ne.s32.totalorder %s142, %s145
      %p151 = scmp.eq.s32.totalorder %s17, 0
      %p152 = por %p150, %p151
      %p153 = scmp.ne.s32.totalorder %s142, %s145
      %p154 = scmp.eq.s32.totalorder %s22, 1
      %p155 = por %p153, %p154
      %p156 = scmp.ne.s32.totalorder %s145, %s146
      %p157 = scmp.eq.s32.totalorder %s22, 0
      %p158 = por %p156, %p157
      %p159 = scmp.ne.s32.totalorder %s145, %s146
      %p160 = scmp.eq.s32.totalorder %s23, 1
      %p161 = por %p159, %p160
      %p163 = scmp.ne.s32.totalorder %s146, %s162
      %p164 = scmp.eq.s32.totalorder %s23, 0
      %p165 = por %p163, %p164
      %s166 = ssub.s32 %s17, %s24
      %p167 = scmp.eq.s32.totalorder %s166, 0
      %s169 = sadd.s32 %s168, 1
      %s170 = scalar_select %p167, %s168, %s169
      %p173 = pneg %p167
      %p174 = scmp.eq.s32.totalorder %s17, 1
      %p175 = por %p173, %p174
      %p176 = scmp.ne.s32.totalorder %s168, %s171
      %p177 = scmp.eq.s32.totalorder %s17, 0
      %p178 = por %p176, %p177
      %p179 = scmp.ne.s32.totalorder %s168, %s171
      %p180 = scmp.eq.s32.totalorder %s22, 1
      %p181 = por %p179, %p180
      %p182 = scmp.ne.s32.totalorder %s171, %s172
      %p183 = scmp.eq.s32.totalorder %s22, 0
      %p184 = por %p182, %p183
      %p185 = scmp.ne.s32.totalorder %s171, %s172
      %p186 = scmp.eq.s32.totalorder %s23, 1
      %p187 = por %p185, %p186
      %p189 = scmp.ne.s32.totalorder %s172, %s188
      %p190 = scmp.eq.s32.totalorder %s23, 0
      %p191 = por %p189, %p190
      %p192 = scmp.le.s32.totalorder 1, %s17
      %p193 = scmp.lt.s32.totalorder %s17, 3
      %p194 = pnand %p192, %p193
      %p195 = pneg %p194
      // Predicated region
      $region9: #{tpu_custom_call.1} parent=5 // pred_check
        _
      $region10: #{tpu_custom_call.1} parent=5 // pred_check_branch
        %197 = sbr.rel (%p194) target = $region12
      $region11: #{tpu_custom_call.1} parent=5 // pred_region
        %s198 = ssub.s32 %s17, 1
        // Predicated region
        $region13: #{tpu_custom_call.1} parent=11 // pred_check
          %p199 = pneg %p64
        $region14: #{tpu_custom_call.1} parent=11 // pred_check_branch
          %201 = sbr.rel (%p199) target = $region16
        $region15: #{tpu_custom_call.1} parent=11 // pred_region
          %203 = vsyncadd [#allocation5], 0
          %s204 = sshll.u32 %s1, 4
          %s205 = int_to_ptr.hbm [resolvable:$true] %s204
          %s206 = sshll.u32 [#allocation4], 4
          %s207 = int_to_ptr.vmem [resolvable:$true] %s206
          %212 = dma.hbm_to_vmem [thread:$0]  %s205, 1024, %s207, [#allocation5], 64, 64, 4
        $region16: #{tpu_custom_call.1} parent=11 // pred_fallthru
          _
        // Predicated region
        $region17: #{tpu_custom_call.1} parent=11 // pred_check
          %p213 = pneg %p85
        $region18: #{tpu_custom_call.1} parent=11 // pred_check_branch
          %215 = sbr.rel (%p213) target = $region20
        $region19: #{tpu_custom_call.1} parent=11 // pred_region
          %217 = vsyncadd [#allocation5], 0
          %s219 = sshll.u32 %s2, 4
          %s220 = int_to_ptr.hbm [resolvable:$true] %s219
          %s221 = sshll.u32 [#allocation6], 4
          %s222 = int_to_ptr.vmem [resolvable:$true] %s221
          %224 = dma.hbm_to_vmem [thread:$0]  %s220, 16, %s222, [#allocation5]
        $region20: #{tpu_custom_call.1} parent=11 // pred_fallthru
          _
        // Predicated region
        $region21: #{tpu_custom_call.1} parent=11 // pred_check
          %p225 = pneg %p106
        $region22: #{tpu_custom_call.1} parent=11 // pred_check_branch
          %227 = sbr.rel (%p225) target = $region24
        $region23: #{tpu_custom_call.1} parent=11 // pred_region
          %229 = vsyncadd [#allocation8], 0
          %s231 = sshll.u32 %s3, 4
          %s232 = int_to_ptr.hbm [resolvable:$true] %s231
          %s233 = sshll.u32 [#allocation7], 4
          %s234 = int_to_ptr.vmem [resolvable:$true] %s233
          %236 = dma.hbm_to_vmem [thread:$0]  %s232, 128, %s234, [#allocation8]
        $region24: #{tpu_custom_call.1} parent=11 // pred_fallthru
          _
      $region12: #{tpu_custom_call.1} parent=5 // pred_fallthru
        _
      %p237 = scmp.lt.s32.totalorder %s17, 2
      // Predicated region
      $region25: #{tpu_custom_call.1} parent=5 // pred_check
        %p238 = pneg %p237
      $region26: #{tpu_custom_call.1} parent=5 // pred_check_branch
        %240 = sbr.rel (%p238) target = $region28
      $region27: #{tpu_custom_call.1} parent=5 // pred_region
        // Predicated region
        $region29: #{tpu_custom_call.1} parent=27 // pred_check
          %p241 = pneg %p37
        $region30: #{tpu_custom_call.1} parent=27 // pred_check_branch
          %243 = sbr.rel (%p241) target = $region32
        $region31: #{tpu_custom_call.1} parent=27 // pred_region
          %s244 = sand.u32 %s27, 1
          %s245 = scalar_lea.sflag [#allocation3], %s244
          %s246 = sand.u32 %s27, 1
          %s247 = smul.addr %s246, 8
          %s248 = scalar_lea.vmem [#allocation2], %s247
          %250 = vsyncadd %s245, 0
          %s251 = smul.addr %s17, 8
          %s252 = scalar_lea.hbm %s0, %s251
          %s254 = sshll.u32 %s252, 4
          %s255 = int_to_ptr.hbm [resolvable:$true] %s254
          %s256 = sshll.u32 %s248, 4
          %s257 = int_to_ptr.vmem [resolvable:$true] %s256
          %259 = dma.hbm_to_vmem [thread:$0]  %s255, 128, %s257, %s245
        $region32: #{tpu_custom_call.1} parent=27 // pred_fallthru
          _
        // Predicated region
        $region33: #{tpu_custom_call.1} parent=27 // pred_check
          %p260 = pneg %p126
        $region34: #{tpu_custom_call.1} parent=27 // pred_check_branch
          %262 = sbr.rel (%p260) target = $region36
        $region35: #{tpu_custom_call.1} parent=27 // pred_region
          %p263 = scmp.lt.s32.totalorder %s17, 1
          %s264 = scalar_select %p263, %s17, 1
          %s265 = scalar_lea.vmem %s4, %s264
        $region36: #{tpu_custom_call.1} parent=27 // pred_fallthru
          _
        // Predicated region
        $region37: #{tpu_custom_call.1} parent=27 // pred_check
          %p266 = pneg %p152
        $region38: #{tpu_custom_call.1} parent=27 // pred_check_branch
          %268 = sbr.rel (%p266) target = $region40
        $region39: #{tpu_custom_call.1} parent=27 // pred_region
          %p269 = scmp.lt.s32.totalorder %s17, 1
          %s270 = scalar_select %p269, %s17, 1
          %s271 = scalar_lea.vmem %s5, %s270
        $region40: #{tpu_custom_call.1} parent=27 // pred_fallthru
          _
      $region28: #{tpu_custom_call.1} parent=5 // pred_fallthru
        _
      %p272 = scmp.le.s32.totalorder 1, %s17
      %p273 = scmp.lt.s32.totalorder %s17, 3
      %p274 = pnand %p272, %p273
      %p275 = pneg %p274
      // Predicated region
      $region41: #{tpu_custom_call.1} parent=5 // pred_check
        _
      $region42: #{tpu_custom_call.1} parent=5 // pred_check_branch
        %277 = sbr.rel (%p274) target = $region44
      $region43: #{tpu_custom_call.1} parent=5 // pred_region
        %s278 = ssub.s32 %s17, 1
        %s279 = sand.u32 %s30, 1
        %s280 = scalar_lea.sflag [#allocation3], %s279
        %s281 = sand.u32 %s30, 1
        %s282 = smul.addr %s281, 8
        %s283 = scalar_lea.vmem [#allocation2], %s282
        // Predicated region
        $region45: #{tpu_custom_call.1} parent=43 // pred_check
          %p284 = pneg %p43
        $region46: #{tpu_custom_call.1} parent=43 // pred_check_branch
          %286 = sbr.rel (%p284) target = $region48
        $region47: #{tpu_custom_call.1} parent=43 // pred_region
          %288 = dma.done %s280, 128
        $region48: #{tpu_custom_call.1} parent=43 // pred_fallthru
          _
        // Predicated region
        $region49: #{tpu_custom_call.1} parent=43 // pred_check
          %p289 = pneg %p64
        $region50: #{tpu_custom_call.1} parent=43 // pred_check_branch
          %291 = sbr.rel (%p289) target = $region52
        $region51: #{tpu_custom_call.1} parent=43 // pred_region
          %293 = dma.done [#allocation5], 1024
        $region52: #{tpu_custom_call.1} parent=43 // pred_fallthru
          _
        // Predicated region
        $region53: #{tpu_custom_call.1} parent=43 // pred_check
          %p294 = pneg %p85
        $region54: #{tpu_custom_call.1} parent=43 // pred_check_branch
          %296 = sbr.rel (%p294) target = $region56
        $region55: #{tpu_custom_call.1} parent=43 // pred_region
          %298 = dma.done [#allocation5], 16
        $region56: #{tpu_custom_call.1} parent=43 // pred_fallthru
          _
        // Predicated region
        $region57: #{tpu_custom_call.1} parent=43 // pred_check
          %p299 = pneg %p106
        $region58: #{tpu_custom_call.1} parent=43 // pred_check_branch
          %301 = sbr.rel (%p299) target = $region60
        $region59: #{tpu_custom_call.1} parent=43 // pred_region
          %303 = dma.done [#allocation8], 128
        $region60: #{tpu_custom_call.1} parent=43 // pred_fallthru
          _
        %s304 = sand.u32 %s30, 1
        %s305 = scalar_lea.sflag [#allocation3], %s304
        %s306 = sand.u32 %s30, 1
        %s307 = smul.addr %s306, 8
        %s308 = scalar_lea.vmem [#allocation2], %s307
        %p309 = pneg %p43
        %p310 = pneg %p40
        %p311 = pneg %p64
        %p312 = pneg %p61
        %p313 = pneg %p85
        %p314 = pneg %p82
        %p315 = pneg %p106
        %p316 = pneg %p103
        %p317 = scmp.lt.s32.totalorder %s22, 1
        %s318 = scalar_select %p317, %s22, 1
        %s319 = scalar_lea.vmem %s4, %s318
        %p320 = pneg %p132
        %p321 = pneg %p129
        %p322 = scmp.lt.s32.totalorder %s22, 1
        %s323 = scalar_select %p322, %s22, 1
        %s324 = scalar_lea.vmem %s5, %s323
        %p325 = pneg %p158
        %p326 = pneg %p155
        %p327 = pneg %p184
        %p328 = pneg %p181
        %p329 = scmp.lt.s32.totalorder %s22, 1
        %s330 = scalar_select %p329, %s22, 1
        %s331 = smul.addr %s330, 2
        %s332 = smul.addr %s331, 4
        %s333 = scalar_lea.vmem %s6, %s332
        %p334 = scmp.lt.s32.totalorder %s22, 1
        %s335 = scalar_select %p334, %s22, 1
        %s336 = scalar_lea.vmem %s4, %s335
        %p337 = scmp.lt.s32.totalorder %s22, 1
        %s338 = scalar_select %p337, %s22, 1
        %s339 = scalar_lea.vmem %s5, %s338
        %p340 = scmp.lt.s32.totalorder %s22, 1
        %s341 = scalar_select %p340, %s22, 1
        %s342 = smul.addr %s341, 2
        %s343 = smul.addr %s342, 4
        %s344 = scalar_lea.vmem %s6, %s343
        %v345 = vld [vmem:[%s283] sm:$0xff]
        %v346 = vpack.c.bf16 %v345, %v345
        %v347 = vld [vmem:[#allocation4] sm:$0xf]
        %v348 = vld [vmem:[#allocation4 + $0x4] sm:$0xf]
        %v349 = vld [vmem:[#allocation4 + $0x8] sm:$0xf]
        %v350 = vld [vmem:[#allocation4 + $0xc] sm:$0xf]
        %v351 = vld [vmem:[#allocation4 + $0x10] sm:$0xf]
        %v352 = vld [vmem:[#allocation4 + $0x14] sm:$0xf]
        %v353 = vld [vmem:[#allocation4 + $0x18] sm:$0xf]
        %v354 = vld [vmem:[#allocation4 + $0x1c] sm:$0xf]
        %v355 = vld [vmem:[#allocation4 + $0x20] sm:$0xf]
        %v356 = vld [vmem:[#allocation4 + $0x24] sm:$0xf]
        %v357 = vld [vmem:[#allocation4 + $0x28] sm:$0xf]
        %v358 = vld [vmem:[#allocation4 + $0x2c] sm:$0xf]
        %v359 = vld [vmem:[#allocation4 + $0x30] sm:$0xf]
        %v360 = vld [vmem:[#allocation4 + $0x34] sm:$0xf]
        %v361 = vld [vmem:[#allocation4 + $0x38] sm:$0xf]
        %v362 = vld [vmem:[#allocation4 + $0x3c] sm:$0xf]
        %v363 = vld [vmem:[#allocation6] sm:$0x1]
        %v365 = vperm.slane %v363, 0
        %v383 = vunpack.c.l.b16 %v347
        %v384 = vunpack.c.l.b16 %v348
        %v385 = vunpack.c.l.b16 %v349
        %v386 = vunpack.c.l.b16 %v350
        %v387 = vunpack.c.l.b16 %v351
        %v388 = vunpack.c.l.b16 %v352
        %v389 = vunpack.c.l.b16 %v353
        %v390 = vunpack.c.l.b16 %v354
        %v391 = vunpack.c.l.b16 %v355
        %v392 = vunpack.c.l.b16 %v356
        %v393 = vunpack.c.l.b16 %v357
        %v394 = vunpack.c.l.b16 %v358
        %v395 = vunpack.c.l.b16 %v359
        %v396 = vunpack.c.l.b16 %v360
        %v397 = vunpack.c.l.b16 %v361
        %v398 = vunpack.c.l.b16 %v362
        %v399 = vpack.c.b16 %v384, %v383
        %v400 = vpack.c.b16 %v386, %v385
        %v401 = vpack.c.b16 %v388, %v387
        %v402 = vpack.c.b16 %v390, %v389
        %v403 = vpack.c.b16 %v392, %v391
        %v404 = vpack.c.b16 %v394, %v393
        %v405 = vpack.c.b16 %v396, %v395
        %v406 = vpack.c.b16 %v398, %v397
        %415 = vmatpush.bf16.msra.mxu0 %v406
        %416 = vmatpush.bf16.msra.mxu0 %v405
        %417 = vmatpush.bf16.msra.mxu0 %v404
        %418 = vmatpush.bf16.msra.mxu0 %v403
        %419 = vmatpush.bf16.msra.mxu0 %v402
        %420 = vmatpush.bf16.msra.mxu0 %v401
        %421 = vmatpush.bf16.msra.mxu0 %v400
        %422 = vmatpush.bf16.msra.mxu0 %v399
        %423 = vmatmul.bf16.gmra.mxu0 %v346
        %v424 = vpop.f32.mrf.mxu0
        %v425 = vadd.f32 %v365, %v424
        %v426 = vpop.f32.mrf.mxu0
        %427 = vdwg.mxu0
        %v428 = vld [vmem:[#allocation7] sm:$0xff]
        %v429 = vadd.f32 %v425, %v428
        %v430 = vld [vmem:[%s336] sm:$0x1]
        %v431 = vld [vmem:[%s339] sm:$0x1]
        %v433 = vperm.slane %v431, 0
        %v436 = vrot.slane %v429, 6
        %vm438 = vcmask 1040384
        %v439 = vsel %vm438, %v430, %v433
        %vm440 = vcmask 1041408
        %v441 = vsel %vm440, %v439, %v436
        %v442 = vpack.c.bf16 %v441, %v441
        %v443 = vpack.c.bf16 %v436, %v436
        %444 = vst [vmem:[%s344] sm:$0xf] %v442
        %445 = vst [vmem:[%s344 + $0x4] sm:$0x1] %v443
        %p446 = scmp.lt.s32.totalorder %s22, 1
        %s447 = scalar_select %p446, %s22, 1
        %s448 = smul.addr %s447, 2
        %s449 = smul.addr %s448, 4
        %s450 = scalar_lea.vmem %s6, %s449
        // Predicated region
        $region61: #{tpu_custom_call.1} parent=43 // pred_check
          %p451 = pneg %p181
        $region62: #{tpu_custom_call.1} parent=43 // pred_check_branch
          %453 = sbr.rel (%p451) target = $region64
        $region63: #{tpu_custom_call.1} parent=43 // pred_region
          _
        $region64: #{tpu_custom_call.1} parent=43 // pred_fallthru
          _
      $region44: #{tpu_custom_call.1} parent=5 // pred_fallthru
        _
      %p454 = scmp.le.s32.totalorder 2, %s17
      // Predicated region
      $region65: #{tpu_custom_call.1} parent=5 // pred_check
        %p455 = pneg %p454
      $region66: #{tpu_custom_call.1} parent=5 // pred_check_branch
        %457 = sbr.rel (%p455) target = $region68
      $region67: #{tpu_custom_call.1} parent=5 // pred_region
        %s458 = ssub.s32 %s17, 2
        // Predicated region
        $region69: #{tpu_custom_call.1} parent=67 // pred_check
          %p459 = pneg %p187
        $region70: #{tpu_custom_call.1} parent=67 // pred_check_branch
          %461 = sbr.rel (%p459) target = $region72
        $region71: #{tpu_custom_call.1} parent=67 // pred_region
          %p462 = scmp.lt.s32.totalorder %s23, 1
          %s463 = scalar_select %p462, %s23, 1
          %s464 = smul.addr %s463, 2
          %s465 = smul.addr %s464, 4
          %s466 = scalar_lea.vmem %s6, %s465
        $region72: #{tpu_custom_call.1} parent=67 // pred_fallthru
          _
      $region68: #{tpu_custom_call.1} parent=5 // pred_fallthru
        _
    $region6: #{tpu_custom_call.1} parent=1 // loop_footer
      %s21 = sadd.s32 1, %s17
    $region7: #{tpu_custom_call.1} parent=1 // loop_footer_branch
      %16 = sbr.rel target = $region3
    $region8: #{tpu_custom_call.1} parent=1 // loop_exit
      _
    %467 = vsyncpa [#allocation3], 1
    %s468 = scalar_lea.sflag [#allocation3], 1
    %469 = vsyncpa %s468, 1
    %470 = vsyncpa [#allocation5], 1
    %471 = vsyncpa [#allocation8], 1

</llo_original>
